<compile_context>
chip_gen: v5e
topology: v5e:2x2
jax: 0.10.0
libtpu: 0.0.40
codegen_flags: <defaults>
</compile_context>

<pallas_src>
import jax
import jax.numpy as jnp
from jax.experimental import pallas as pl
from jax.experimental.pallas import tpu as pltpu


def _round_up(x, m):
    return (x + m - 1) // m * m


def _make_embedding_kernel(tb, hw):
    """Kernel closure over the batch-tile size (tb images) and spatial size."""

    def kernel(patches_ref, wc_ref, bc_ref, we_ref, be_ref, out_ref):
        # patches_ref : [tb*hw, CKKp]  bf16  lane-padded im2col rows (tb images)
        # wc_ref      : [CKKp, Fp]     bf16  conv weight (zero-padded)
        # bc_ref      : [1, Fp]        f32   conv bias   (zero-padded)
        # we_ref      : [Fp, Ep]       bf16  projection weight, pre-scaled by 1/HW
        # be_ref      : [1, Ep]        f32   projection bias (zero-padded)
        # out_ref     : [tb, Ep]       f32   L2-normalized embeddings (pad cols = 0)

        # conv3x3 as one big im2col matmul on the MXU (bf16 in, f32 accumulate)
        feat = jnp.dot(patches_ref[...], wc_ref[...],
                       preferred_element_type=jnp.float32)          # [tb*hw, Fp]
        feat = jnp.maximum(feat + bc_ref[...], 0.0)                  # f32 epilogue

        # per-image sum pool over spatial positions (1/HW folded into we)
        fp = feat.shape[-1]
        pooled = jnp.sum(feat.reshape(tb, hw, fp), axis=1)           # [tb, Fp] f32

        # embedding projection for the whole batch tile at once
        emb = jnp.dot(pooled.astype(jnp.bfloat16), we_ref[...],
                      preferred_element_type=jnp.float32)            # [tb, Ep]
        emb = emb + be_ref[...]

        # L2 normalize (padded E columns are exactly zero -> norm unchanged)
        inv_norm = jax.lax.rsqrt(
            jnp.sum(emb * emb, axis=-1, keepdims=True) + 1e-12)
        out_ref[...] = emb * inv_norm                                # lane-dense store

    return kernel


def extract_embeddings(x_nchw, wc, bc, we, be):
    """x_nchw: [B, C, H, W] float32 -> embeddings [B, E] float32."""
    B, C, H, W = x_nchw.shape
    K = 3
    HW = H * W
    CKK = K * K * C
    F = wc.shape[-1]
    E = we.shape[-1]

    CKKp = _round_up(CKK, 128)
    Fp = _round_up(F, 128)
    Ep = _round_up(E, 128)

    # --- glue: NCHW -> NHWC, pad=1, im2col -> [B*HW, CKK] ---
    x = jnp.transpose(x_nchw, (0, 2, 3, 1))
    xp = jnp.pad(x, ((0, 0), (1, 1), (1, 1), (0, 0)))
    cols = [xp[:, i:i + H, j:j + W, :] for i in range(K) for j in range(K)]
    patches = jnp.stack(cols, axis=3).reshape(B * HW, CKK)

    # lane padding + bf16 matmul inputs (f32 accumulation happens in-kernel)
    patches_p = jnp.zeros((B * HW, CKKp), jnp.bfloat16).at[:, :CKK].set(
        patches.astype(jnp.bfloat16))
    wc_p = jnp.zeros((CKKp, Fp), jnp.bfloat16).at[:CKK, :F].set(
        wc.astype(jnp.bfloat16))
    bc_p = jnp.zeros((1, Fp), jnp.float32).at[:, :F].set(
        bc.reshape(1, F).astype(jnp.float32))
    # fold the 1/HW mean scale into the projection weight
    we_p = jnp.zeros((Fp, Ep), jnp.bfloat16).at[:F, :E].set(
        (we / HW).astype(jnp.bfloat16))
    be_p = jnp.zeros((1, Ep), jnp.float32).at[:, :E].set(
        be.reshape(1, E).astype(jnp.float32))

    # batch tile: target ~512 im2col rows per grid step, tb must divide B
    tb = min(B, max(1, 512 // HW))
    while B % tb:
        tb -= 1
    grid = (B // tb,)

    kernel = _make_embedding_kernel(tb, HW)

    grid_spec = pltpu.PrefetchScalarGridSpec(
        num_scalar_prefetch=0,
        grid=grid,
        in_specs=[
            pl.BlockSpec((tb * HW, CKKp), lambda i: (i, 0)),
            pl.BlockSpec((CKKp, Fp), lambda i: (0, 0)),
            pl.BlockSpec((1, Fp), lambda i: (0, 0)),
            pl.BlockSpec((Fp, Ep), lambda i: (0, 0)),
            pl.BlockSpec((1, Ep), lambda i: (0, 0)),
        ],
        out_specs=pl.BlockSpec((tb, Ep), lambda i: (i, 0)),
    )

    out_padded = pl.pallas_call(
        kernel,
        out_shape=jax.ShapeDtypeStruct((B, Ep), jnp.float32),
        grid_spec=grid_spec,
        compiler_params=pltpu.CompilerParams(
            dimension_semantics=("parallel",),
            vmem_limit_bytes=32 * 1024 * 1024,
        ),
    )(patches_p, wc_p, bc_p, we_p, be_p)

    return out_padded[:, :E]


def reference_embeddings(x_nchw, wc, bc, we, be):
    """Pure-JAX f32 reference of the same forward pass (correctness check)."""
    B, C, H, W = x_nchw.shape
    K = 3
    x = jnp.transpose(x_nchw, (0, 2, 3, 1))
    xp = jnp.pad(x, ((0, 0), (1, 1), (1, 1), (0, 0)))
    cols = [xp[:, i:i + H, j:j + W, :] for i in range(K) for j in range(K)]
    patches = jnp.stack(cols, axis=3).reshape(B, H * W, K * K * C)
    feat = jnp.maximum(jnp.einsum("bpk,kf->bpf", patches, wc) + bc, 0.0)
    pooled = jnp.mean(feat, axis=1)
    emb = pooled @ we + be
    return emb / jnp.sqrt(jnp.sum(emb * emb, axis=-1, keepdims=True) + 1e-12)


if __name__ == "__main__":
    # small shapes consistent with an image-embedding forward pass
    B, C, H, W = 2, 4, 16, 16
    F = 32   # conv filters
    E = 64   # embedding dim
    K = 3

    key = jax.random.PRNGKey(0)
    kx, kwc, kbc, kwe, kbe = jax.random.split(key, 5)

    x = jax.random.normal(kx, (B, C, H, W), dtype=jnp.float32)
    wc = jax.random.normal(kwc, (K * K * C, F), dtype=jnp.float32) * 0.1
    bc = jax.random.normal(kbc, (F,), dtype=jnp.float32) * 0.1
    we = jax.random.normal(kwe, (F, E), dtype=jnp.float32) * 0.1
    be = jax.random.normal(kbe, (E,), dtype=jnp.float32) * 0.1

    out = jax.block_until_ready(extract_embeddings(x, wc, bc, we, be))
    ref = jax.block_until_ready(reference_embeddings(x, wc, bc, we, be))

    assert out.shape == (B, E), out.shape
    # bf16 matmul inputs (f32 accumulation) vs. pure-f32 reference -> loosened tol
    assert jnp.allclose(out, ref, atol=2e-2, rtol=2e-2), (
        float(jnp.max(jnp.abs(out - ref)))
    )
    print("KERNEL_OK")
</pallas_src>

<mosaic_0001>
module attributes {stable_mosaic.version = 11 : i64} {
  func.func @kernel(%arg0: i32, %arg1: memref<512x128xbf16, #tpu.memory_space<vmem>>, %arg2: memref<128x128xbf16, #tpu.memory_space<vmem>>, %arg3: memref<1x128xf32, #tpu.memory_space<vmem>>, %arg4: memref<128x128xbf16, #tpu.memory_space<vmem>>, %arg5: memref<1x128xf32, #tpu.memory_space<vmem>>, %arg6: memref<2x128xf32, #tpu.memory_space<vmem>>) attributes {dimension_semantics = [#tpu.dimension_semantics<parallel>], iteration_bounds = array<i64: 1>, scalar_prefetch = 0 : i64, scratch_operands = 0 : i64, tpu.core_type = #tpu.core_type<tc>, window_params = [{transform_indices = @transform_0, window_bounds = array<i64: 512, 128>}, {pipeline_mode = #tpu.pipeline_mode<synchronous>, transform_indices = @transform_1, window_bounds = array<i64: 128, 128>}, {pipeline_mode = #tpu.pipeline_mode<synchronous>, transform_indices = @transform_2, window_bounds = array<i64: 1, 128>}, {pipeline_mode = #tpu.pipeline_mode<synchronous>, transform_indices = @transform_3, window_bounds = array<i64: 128, 128>}, {pipeline_mode = #tpu.pipeline_mode<synchronous>, transform_indices = @transform_4, window_bounds = array<i64: 1, 128>}, {transform_indices = @transform_5, window_bounds = array<i64: 2, 128>}]} {
    %c0 = arith.constant 0 : index
    %c0_0 = arith.constant 0 : index
    %0 = vector.load %arg1[%c0, %c0_0] : memref<512x128xbf16, #tpu.memory_space<vmem>>, vector<512x128xbf16>
    %c0_1 = arith.constant 0 : index
    %c0_2 = arith.constant 0 : index
    %1 = vector.load %arg2[%c0_1, %c0_2] : memref<128x128xbf16, #tpu.memory_space<vmem>>, vector<128x128xbf16>
    %cst = arith.constant dense<0.000000e+00> : vector<512x128xf32>
    %2 = tpu.matmul %0, %1, %cst {dimension_numbers = #tpu.dot_dimension_numbers<[1], [0], [0], [1], [0, 0, 1, 1], [], []>} : vector<512x128xbf16>, vector<128x128xbf16>, vector<512x128xf32> -> vector<512x128xf32>
    %c0_3 = arith.constant 0 : index
    %c0_4 = arith.constant 0 : index
    %3 = vector.load %arg3[%c0_3, %c0_4] : memref<1x128xf32, #tpu.memory_space<vmem>>, vector<1x128xf32>
    %4 = vector.broadcast %3 : vector<1x128xf32> to vector<512x128xf32>
    %5 = arith.addf %2, %4 : vector<512x128xf32>
    %cst_5 = arith.constant 0.000000e+00 : f32
    %6 = vector.broadcast %cst_5 : f32 to vector<512x128xf32>
    %7 = arith.maximumf %5, %6 : vector<512x128xf32>
    %8 = vector.shape_cast %7 : vector<512x128xf32> to vector<2x256x128xf32>
    %cst_6 = arith.constant dense<0.000000e+00> : vector<2x128xf32>
    %9 = vector.multi_reduction <add>, %8, %cst_6 [1] : vector<2x256x128xf32> to vector<2x128xf32>
    %10 = arith.truncf %9 : vector<2x128xf32> to vector<2x128xbf16>
    %c0_7 = arith.constant 0 : index
    %c0_8 = arith.constant 0 : index
    %11 = vector.load %arg4[%c0_7, %c0_8] : memref<128x128xbf16, #tpu.memory_space<vmem>>, vector<128x128xbf16>
    %cst_9 = arith.constant dense<0.000000e+00> : vector<2x128xf32>
    %12 = tpu.matmul %10, %11, %cst_9 {dimension_numbers = #tpu.dot_dimension_numbers<[1], [0], [0], [1], [0, 0, 1, 1], [], []>} : vector<2x128xbf16>, vector<128x128xbf16>, vector<2x128xf32> -> vector<2x128xf32>
    %c0_10 = arith.constant 0 : index
    %c0_11 = arith.constant 0 : index
    %13 = vector.load %arg5[%c0_10, %c0_11] : memref<1x128xf32, #tpu.memory_space<vmem>>, vector<1x128xf32>
    %14 = vector.broadcast %13 : vector<1x128xf32> to vector<2x128xf32>
    %15 = arith.addf %12, %14 : vector<2x128xf32>
    %16 = arith.mulf %15, %15 : vector<2x128xf32>
    %cst_12 = arith.constant dense<0.000000e+00> : vector<2xf32>
    %17 = vector.multi_reduction <add>, %16, %cst_12 [1] : vector<2x128xf32> to vector<2xf32>
    %18 = vector.shape_cast %17 : vector<2xf32> to vector<2x1xf32>
    %cst_13 = arith.constant 9.99999996E-13 : f32
    %19 = vector.broadcast %cst_13 : f32 to vector<2x1xf32>
    %20 = arith.addf %18, %19 : vector<2x1xf32>
    %21 = math.rsqrt %20 : vector<2x1xf32>
    %22 = vector.broadcast %21 : vector<2x1xf32> to vector<2x128xf32>
    %23 = arith.mulf %15, %22 : vector<2x128xf32>
    %c0_14 = arith.constant 0 : index
    %c0_15 = arith.constant 0 : index
    %24 = vector.load %arg6[%c0_14, %c0_15] : memref<2x128xf32, #tpu.memory_space<vmem>>, vector<2x128xf32>
    tpu.vector_store %arg6[%c0_14, %c0_15], %23 {strides = array<i32>} : memref<2x128xf32, #tpu.memory_space<vmem>>, vector<2x128xf32>,
    return
  }
  func.func @transform_0(%arg0: i32) -> (i32, i32) {
    %c0_i32 = arith.constant 0 : i32
    %c0_i32_0 = arith.constant 0 : i32
    return %arg0, %c0_i32 : i32, i32
  }
  func.func @transform_1(%arg0: i32) -> (i32, i32) {
    %c0_i32 = arith.constant 0 : i32
    %c0_i32_0 = arith.constant 0 : i32
    %c0_i32_1 = arith.constant 0 : i32
    return %c0_i32, %c0_i32_0 : i32, i32
  }
  func.func @transform_2(%arg0: i32) -> (i32, i32) {
    %c0_i32 = arith.constant 0 : i32
    %c0_i32_0 = arith.constant 0 : i32
    %c0_i32_1 = arith.constant 0 : i32
    return %c0_i32, %c0_i32_0 : i32, i32
  }
  func.func @transform_3(%arg0: i32) -> (i32, i32) {
    %c0_i32 = arith.constant 0 : i32
    %c0_i32_0 = arith.constant 0 : i32
    %c0_i32_1 = arith.constant 0 : i32
    return %c0_i32, %c0_i32_0 : i32, i32
  }
  func.func @transform_4(%arg0: i32) -> (i32, i32) {
    %c0_i32 = arith.constant 0 : i32
    %c0_i32_0 = arith.constant 0 : i32
    %c0_i32_1 = arith.constant 0 : i32
    return %c0_i32, %c0_i32_0 : i32, i32
  }
  func.func @transform_5(%arg0: i32) -> (i32, i32) {
    %c0_i32 = arith.constant 0 : i32
    %c0_i32_0 = arith.constant 0 : i32
    return %arg0, %c0_i32 : i32, i32
  }
}

</mosaic_0001>

<llo_original>
// kernel: tpu_custom_call.1
$region0: #{tpu_custom_call.1}
  #allocation0 [shape = 'u32[]', space=smem, size = 0x4, offset = 0x4, fixed_abs, tag = 'smem constant byte address 0x4 - core index']
  #allocation1 [shape = 'u32[72,128]{1,0:T(1,128)}', space=vmem, size = 0x9000, scoped, tag = 'internal scratch']
  %s0 = inlined_call_operand.hbm [shape: bf16[512,128], index: 0, kind: input, shape index: {}]
  %s1 = inlined_call_operand.hbm [shape: bf16[128,128], index: 1, kind: input, shape index: {}]
  %s2 = inlined_call_operand.vmem [shape: f32[1,128], index: 2, kind: input, shape index: {}]
  %s3 = inlined_call_operand.hbm [shape: bf16[128,128], index: 3, kind: input, shape index: {}]
  %s4 = inlined_call_operand.vmem [shape: f32[1,128], index: 4, kind: input, shape index: {}]
  %s5 = inlined_call_operand.hbm [shape: f32[2,128], index: 5, kind: output, shape index: {}]
  %s6 = sld [smem:[#allocation0]]
  $region42: #{tpu_custom_call.1} parent=0
    _
  %s8 = ssub.s32 1, %s6
  %s9 = scalar_select 0, %s8, %s6
  $region1: #{tpu_custom_call.1} parent=0
    #allocation2 [shape = 'u8[131072]{0}', space=vmem, size = 0x20000, scoped, tag = 'input window, operand 0, single buffered']
    #allocation3 [shape = 's32[1]{0}', space=sflag, size = 0x4, scoped, tag = 'scoped memory for tpu_custom_call.1']
    #allocation4 [shape = 's32[1]{0}', space=sflag, size = 0x4, scoped, tag = 'scoped memory for tpu_custom_call.1']
    #allocation5 [shape = 'u8[32768]{0}', space=vmem, size = 0x8000, scoped, tag = 'input window, operand 1, single buffered']
    #allocation6 [shape = 's32[1]{0}', space=sflag, size = 0x4, scoped, tag = 'scoped memory for tpu_custom_call.1']
    #allocation7 [shape = 'u8[32768]{0}', space=vmem, size = 0x8000, scoped, tag = 'input window, operand 3, single buffered']
    #allocation8 [shape = 'u8[1024]{0}', space=vmem, size = 0x400, scoped, tag = 'output window, operand 0, single buffered']
    %10 = vsyncpa [#allocation3], 0
    %11 = vsyncpa [#allocation6], 0
    %12 = vsyncpa [#allocation4], 0
    // Predicated region
    $region2: #{tpu_custom_call.1} parent=1 // pred_check
      _
    $region3: #{tpu_custom_call.1} parent=1 // pred_check_branch
      %14 = sbr.rel (0) target = $region5
    $region4: #{tpu_custom_call.1} parent=1 // pred_region
      %16 = vsyncadd [#allocation3], 0
      %s17 = sshll.u32 %s0, 4
      %s18 = int_to_ptr.hbm [resolvable:$true] %s17
      %s19 = sshll.u32 [#allocation2], 4
      %s20 = int_to_ptr.vmem [resolvable:$true] %s19
      %25 = dma.hbm_to_vmem [thread:$0]  %s18, 4096, %s20, [#allocation3], 64, 64, 4
    $region5: #{tpu_custom_call.1} parent=1 // pred_fallthru
      _
    // Predicated region
    $region6: #{tpu_custom_call.1} parent=1 // pred_check
      _
    $region7: #{tpu_custom_call.1} parent=1 // pred_check_branch
      %27 = sbr.rel (0) target = $region9
    $region8: #{tpu_custom_call.1} parent=1 // pred_region
      %29 = vsyncadd [#allocation6], 0
      %s30 = sshll.u32 %s1, 4
      %s31 = int_to_ptr.hbm [resolvable:$true] %s30
      %s32 = sshll.u32 [#allocation5], 4
      %s33 = int_to_ptr.vmem [resolvable:$true] %s32
      %38 = dma.hbm_to_vmem [thread:$0]  %s31, 1024, %s33, [#allocation6], 64, 64, 4
    $region9: #{tpu_custom_call.1} parent=1 // pred_fallthru
      _
    // Predicated region
    $region10: #{tpu_custom_call.1} parent=1 // pred_check
      _
    $region11: #{tpu_custom_call.1} parent=1 // pred_check_branch
      %40 = sbr.rel (0) target = $region13
    $region12: #{tpu_custom_call.1} parent=1 // pred_region
      _
    $region13: #{tpu_custom_call.1} parent=1 // pred_fallthru
      _
    // Predicated region
    $region14: #{tpu_custom_call.1} parent=1 // pred_check
      _
    $region15: #{tpu_custom_call.1} parent=1 // pred_check_branch
      %42 = sbr.rel (0) target = $region17
    $region16: #{tpu_custom_call.1} parent=1 // pred_region
      %44 = vsyncadd [#allocation6], 0
      %s45 = sshll.u32 %s3, 4
      %s46 = int_to_ptr.hbm [resolvable:$true] %s45
      %s47 = sshll.u32 [#allocation7], 4
      %s48 = int_to_ptr.vmem [resolvable:$true] %s47
      %53 = dma.hbm_to_vmem [thread:$0]  %s46, 1024, %s48, [#allocation6], 64, 64, 4
    $region17: #{tpu_custom_call.1} parent=1 // pred_fallthru
      _
    // Predicated region
    $region18: #{tpu_custom_call.1} parent=1 // pred_check
      _
    $region19: #{tpu_custom_call.1} parent=1 // pred_check_branch
      %55 = sbr.rel (0) target = $region21
    $region20: #{tpu_custom_call.1} parent=1 // pred_region
      _
    $region21: #{tpu_custom_call.1} parent=1 // pred_fallthru
      _
    // Predicated region
    $region22: #{tpu_custom_call.1} parent=1 // pred_check
      _
    $region23: #{tpu_custom_call.1} parent=1 // pred_check_branch
      %57 = sbr.rel (0) target = $region25
    $region24: #{tpu_custom_call.1} parent=1 // pred_region
      %59 = dma.done [#allocation3], 4096
    $region25: #{tpu_custom_call.1} parent=1 // pred_fallthru
      _
    // Predicated region
    $region26: #{tpu_custom_call.1} parent=1 // pred_check
      _
    $region27: #{tpu_custom_call.1} parent=1 // pred_check_branch
      %61 = sbr.rel (0) target = $region29
    $region28: #{tpu_custom_call.1} parent=1 // pred_region
      %63 = dma.done [#allocation6], 1024
    $region29: #{tpu_custom_call.1} parent=1 // pred_fallthru
      _
    // Predicated region
    $region30: #{tpu_custom_call.1} parent=1 // pred_check
      _
    $region31: #{tpu_custom_call.1} parent=1 // pred_check_branch
      %65 = sbr.rel (0) target = $region33
    $region32: #{tpu_custom_call.1} parent=1 // pred_region
      %67 = dma.done [#allocation6], 1024
    $region33: #{tpu_custom_call.1} parent=1 // pred_fallthru
      _
    %v68 = vld [vmem:[#allocation2] sm:$0xf]
    %v69 = vld [vmem:[#allocation2 + $0x4] sm:$0xf]
    %v70 = vld [vmem:[#allocation2 + $0x8] sm:$0xf]
    %v71 = vld [vmem:[#allocation2 + $0xc] sm:$0xf]
    %v72 = vld [vmem:[#allocation2 + $0x10] sm:$0xf]
    %v73 = vld [vmem:[#allocation2 + $0x14] sm:$0xf]
    %v74 = vld [vmem:[#allocation2 + $0x18] sm:$0xf]
    %v75 = vld [vmem:[#allocation2 + $0x1c] sm:$0xf]
    %v76 = vld [vmem:[#allocation2 + $0x20] sm:$0xf]
    %v77 = vld [vmem:[#allocation2 + $0x24] sm:$0xf]
    %v78 = vld [vmem:[#allocation2 + $0x28] sm:$0xf]
    %v79 = vld [vmem:[#allocation2 + $0x2c] sm:$0xf]
    %v80 = vld [vmem:[#allocation2 + $0x30] sm:$0xf]
    %v81 = vld [vmem:[#allocation2 + $0x34] sm:$0xf]
    %v82 = vld [vmem:[#allocation2 + $0x38] sm:$0xf]
    %v83 = vld [vmem:[#allocation2 + $0x3c] sm:$0xf]
    %v84 = vld [vmem:[#allocation2 + $0x40] sm:$0xf]
    %v85 = vld [vmem:[#allocation2 + $0x44] sm:$0xf]
    %v86 = vld [vmem:[#allocation2 + $0x48] sm:$0xf]
    %v87 = vld [vmem:[#allocation2 + $0x4c] sm:$0xf]
    %v88 = vld [vmem:[#allocation2 + $0x50] sm:$0xf]
    %v89 = vld [vmem:[#allocation2 + $0x54] sm:$0xf]
    %v90 = vld [vmem:[#allocation2 + $0x58] sm:$0xf]
    %v91 = vld [vmem:[#allocation2 + $0x5c] sm:$0xf]
    %v92 = vld [vmem:[#allocation2 + $0x60] sm:$0xf]
    %v93 = vld [vmem:[#allocation2 + $0x64] sm:$0xf]
    %v94 = vld [vmem:[#allocation2 + $0x68] sm:$0xf]
    %v95 = vld [vmem:[#allocation2 + $0x6c] sm:$0xf]
    %v96 = vld [vmem:[#allocation2 + $0x70] sm:$0xf]
    %v97 = vld [vmem:[#allocation2 + $0x74] sm:$0xf]
    %v98 = vld [vmem:[#allocation2 + $0x78] sm:$0xf]
    %v99 = vld [vmem:[#allocation2 + $0x7c] sm:$0xf]
    %v100 = vld [vmem:[#allocation2 + $0x80] sm:$0xf]
    %v101 = vld [vmem:[#allocation2 + $0x84] sm:$0xf]
    %v102 = vld [vmem:[#allocation2 + $0x88] sm:$0xf]
    %v103 = vld [vmem:[#allocation2 + $0x8c] sm:$0xf]
    %v104 = vld [vmem:[#allocation2 + $0x90] sm:$0xf]
    %v105 = vld [vmem:[#allocation2 + $0x94] sm:$0xf]
    %v106 = vld [vmem:[#allocation2 + $0x98] sm:$0xf]
    %v107 = vld [vmem:[#allocation2 + $0x9c] sm:$0xf]
    %v108 = vld [vmem:[#allocation2 + $0xa0] sm:$0xf]
    %v109 = vld [vmem:[#allocation2 + $0xa4] sm:$0xf]
    %v110 = vld [vmem:[#allocation2 + $0xa8] sm:$0xf]
    %v111 = vld [vmem:[#allocation2 + $0xac] sm:$0xf]
    %v112 = vld [vmem:[#allocation2 + $0xb0] sm:$0xf]
    %v113 = vld [vmem:[#allocation2 + $0xb4] sm:$0xf]
    %v114 = vld [vmem:[#allocation2 + $0xb8] sm:$0xf]
    %v115 = vld [vmem:[#allocation2 + $0xbc] sm:$0xf]
    %v116 = vld [vmem:[#allocation2 + $0xc0] sm:$0xf]
    %v117 = vld [vmem:[#allocation2 + $0xc4] sm:$0xf]
    %v118 = vld [vmem:[#allocation2 + $0xc8] sm:$0xf]
    %v119 = vld [vmem:[#allocation2 + $0xcc] sm:$0xf]
    %v120 = vld [vmem:[#allocation2 + $0xd0] sm:$0xf]
    %v121 = vld [vmem:[#allocation2 + $0xd4] sm:$0xf]
    %v122 = vld [vmem:[#allocation2 + $0xd8] sm:$0xf]
    %v123 = vld [vmem:[#allocation2 + $0xdc] sm:$0xf]
    %v124 = vld [vmem:[#allocation2 + $0xe0] sm:$0xf]
    %v125 = vld [vmem:[#allocation2 + $0xe4] sm:$0xf]
    %v126 = vld [vmem:[#allocation2 + $0xe8] sm:$0xf]
    %v127 = vld [vmem:[#allocation2 + $0xec] sm:$0xf]
    %v128 = vld [vmem:[#allocation2 + $0xf0] sm:$0xf]
    %v129 = vld [vmem:[#allocation2 + $0xf4] sm:$0xf]
    %v130 = vld [vmem:[#allocation2 + $0xf8] sm:$0xf]
    %v131 = vld [vmem:[#allocation2 + $0xfc] sm:$0xf]
    %v132 = vld [vmem:[#allocation5] sm:$0xf]
    %v133 = vld [vmem:[#allocation5 + $0x4] sm:$0xf]
    %v134 = vld [vmem:[#allocation5 + $0x8] sm:$0xf]
    %v135 = vld [vmem:[#allocation5 + $0xc] sm:$0xf]
    %v136 = vld [vmem:[#allocation5 + $0x10] sm:$0xf]
    %v137 = vld [vmem:[#allocation5 + $0x14] sm:$0xf]
    %v138 = vld [vmem:[#allocation5 + $0x18] sm:$0xf]
    %v139 = vld [vmem:[#allocation5 + $0x1c] sm:$0xf]
    %v140 = vld [vmem:[#allocation5 + $0x20] sm:$0xf]
    %v141 = vld [vmem:[#allocation5 + $0x24] sm:$0xf]
    %v142 = vld [vmem:[#allocation5 + $0x28] sm:$0xf]
    %v143 = vld [vmem:[#allocation5 + $0x2c] sm:$0xf]
    %v144 = vld [vmem:[#allocation5 + $0x30] sm:$0xf]
    %v145 = vld [vmem:[#allocation5 + $0x34] sm:$0xf]
    %v146 = vld [vmem:[#allocation5 + $0x38] sm:$0xf]
    %v147 = vld [vmem:[#allocation5 + $0x3c] sm:$0xf]
    %v148 = vld [vmem:[%s2] sm:$0x1]
    %v150 = vperm.slane %v148, 0
    %v216 = vunpack.c.l.b16 %v68
    %v217 = vunpack.c.l.b16 %v69
    %v218 = vunpack.c.l.b16 %v70
    %v219 = vunpack.c.l.b16 %v71
    %v220 = vunpack.c.l.b16 %v72
    %v221 = vunpack.c.l.b16 %v73
    %v222 = vunpack.c.l.b16 %v74
    %v223 = vunpack.c.l.b16 %v75
    %v224 = vunpack.c.l.b16 %v76
    %v225 = vunpack.c.l.b16 %v77
    %v226 = vunpack.c.l.b16 %v78
    %v227 = vunpack.c.l.b16 %v79
    %v228 = vunpack.c.l.b16 %v80
    %v229 = vunpack.c.l.b16 %v81
    %v230 = vunpack.c.l.b16 %v82
    %v231 = vunpack.c.l.b16 %v83
    %v232 = vunpack.c.l.b16 %v84
    %v233 = vunpack.c.l.b16 %v85
    %v234 = vunpack.c.l.b16 %v86
    %v235 = vunpack.c.l.b16 %v87
    %v236 = vunpack.c.l.b16 %v88
    %v237 = vunpack.c.l.b16 %v89
    %v238 = vunpack.c.l.b16 %v90
    %v239 = vunpack.c.l.b16 %v91
    %v240 = vunpack.c.l.b16 %v92
    %v241 = vunpack.c.l.b16 %v93
    %v242 = vunpack.c.l.b16 %v94
    %v243 = vunpack.c.l.b16 %v95
    %v244 = vunpack.c.l.b16 %v96
    %v245 = vunpack.c.l.b16 %v97
    %v246 = vunpack.c.l.b16 %v98
    %v247 = vunpack.c.l.b16 %v99
    %v248 = vunpack.c.l.b16 %v100
    %v249 = vunpack.c.l.b16 %v101
    %v250 = vunpack.c.l.b16 %v102
    %v251 = vunpack.c.l.b16 %v103
    %v252 = vunpack.c.l.b16 %v104
    %v253 = vunpack.c.l.b16 %v105
    %v254 = vunpack.c.l.b16 %v106
    %v255 = vunpack.c.l.b16 %v107
    %v256 = vunpack.c.l.b16 %v108
    %v257 = vunpack.c.l.b16 %v109
    %v258 = vunpack.c.l.b16 %v110
    %v259 = vunpack.c.l.b16 %v111
    %v260 = vunpack.c.l.b16 %v112
    %v261 = vunpack.c.l.b16 %v113
    %v262 = vunpack.c.l.b16 %v114
    %v263 = vunpack.c.l.b16 %v115
    %v264 = vunpack.c.l.b16 %v116
    %v265 = vunpack.c.l.b16 %v117
    %v266 = vunpack.c.l.b16 %v118
    %v267 = vunpack.c.l.b16 %v119
    %v268 = vunpack.c.l.b16 %v120
    %v269 = vunpack.c.l.b16 %v121
    %v270 = vunpack.c.l.b16 %v122
    %v271 = vunpack.c.l.b16 %v123
    %v272 = vunpack.c.l.b16 %v124
    %v273 = vunpack.c.l.b16 %v125
    %v274 = vunpack.c.l.b16 %v126
    %v275 = vunpack.c.l.b16 %v127
    %v276 = vunpack.c.l.b16 %v128
    %v277 = vunpack.c.l.b16 %v129
    %v278 = vunpack.c.l.b16 %v130
    %v279 = vunpack.c.l.b16 %v131
    %v280 = vpack.c.b16 %v217, %v216
    %v281 = vpack.c.b16 %v219, %v218
    %v282 = vpack.c.b16 %v221, %v220
    %v283 = vpack.c.b16 %v223, %v222
    %v284 = vpack.c.b16 %v225, %v224
    %v285 = vpack.c.b16 %v227, %v226
    %v286 = vpack.c.b16 %v229, %v228
    %v287 = vpack.c.b16 %v231, %v230
    %v288 = vpack.c.b16 %v233, %v232
    %v289 = vpack.c.b16 %v235, %v234
    %v290 = vpack.c.b16 %v237, %v236
    %v291 = vpack.c.b16 %v239, %v238
    %v292 = vpack.c.b16 %v241, %v240
    %v293 = vpack.c.b16 %v243, %v242
    %v294 = vpack.c.b16 %v245, %v244
    %v295 = vpack.c.b16 %v247, %v246
    %v296 = vpack.c.b16 %v249, %v248
    %v297 = vpack.c.b16 %v251, %v250
    %v298 = vpack.c.b16 %v253, %v252
    %v299 = vpack.c.b16 %v255, %v254
    %v300 = vpack.c.b16 %v257, %v256
    %v301 = vpack.c.b16 %v259, %v258
    %v302 = vpack.c.b16 %v261, %v260
    %v303 = vpack.c.b16 %v263, %v262
    %v304 = vpack.c.b16 %v265, %v264
    %v305 = vpack.c.b16 %v267, %v266
    %v306 = vpack.c.b16 %v269, %v268
    %v307 = vpack.c.b16 %v271, %v270
    %v308 = vpack.c.b16 %v273, %v272
    %v309 = vpack.c.b16 %v275, %v274
    %v310 = vpack.c.b16 %v277, %v276
    %v311 = vpack.c.b16 %v279, %v278
    %v360 = vunpack.c.l.b16 %v132
    %v361 = vunpack.c.l.b16 %v133
    %v362 = vunpack.c.l.b16 %v134
    %v363 = vunpack.c.l.b16 %v135
    %v364 = vunpack.c.l.b16 %v136
    %v365 = vunpack.c.l.b16 %v137
    %v366 = vunpack.c.l.b16 %v138
    %v367 = vunpack.c.l.b16 %v139
    %v368 = vunpack.c.l.b16 %v140
    %v369 = vunpack.c.l.b16 %v141
    %v370 = vunpack.c.l.b16 %v142
    %v371 = vunpack.c.l.b16 %v143
    %v372 = vunpack.c.l.b16 %v144
    %v373 = vunpack.c.l.b16 %v145
    %v374 = vunpack.c.l.b16 %v146
    %v375 = vunpack.c.l.b16 %v147
    %v376 = vpack.c.b16 %v361, %v360
    %v377 = vpack.c.b16 %v363, %v362
    %v378 = vpack.c.b16 %v365, %v364
    %v379 = vpack.c.b16 %v367, %v366
    %v380 = vpack.c.b16 %v369, %v368
    %v381 = vpack.c.b16 %v371, %v370
    %v382 = vpack.c.b16 %v373, %v372
    %v383 = vpack.c.b16 %v375, %v374
    %392 = vmatpush.bf16.msra.mxu0 %v383
    %393 = vmatpush.bf16.msra.mxu0 %v382
    %394 = vmatpush.bf16.msra.mxu0 %v381
    %395 = vmatpush.bf16.msra.mxu0 %v380
    %396 = vmatpush.bf16.msra.mxu0 %v379
    %397 = vmatpush.bf16.msra.mxu0 %v378
    %398 = vmatpush.bf16.msra.mxu0 %v377
    %399 = vmatpush.bf16.msra.mxu0 %v376
    %400 = vmatmul.bf16.gmra.mxu0 %v280
    %v401 = vpop.f32.mrf.mxu0
    %v402 = vadd.f32 %v150, %v401
    %v403 = vpop.f32.mrf.mxu0
    %v404 = vadd.f32 %v150, %v403
    %405 = vmatmul.bf16.gmra.mxu0 %v281
    %v406 = vpop.f32.mrf.mxu0
    %v407 = vadd.f32 %v150, %v406
    %v408 = vpop.f32.mrf.mxu0
    %v409 = vadd.f32 %v150, %v408
    %410 = vmatmul.bf16.gmra.mxu0 %v282
    %v411 = vpop.f32.mrf.mxu0
    %v412 = vadd.f32 %v150, %v411
    %v413 = vpop.f32.mrf.mxu0
    %v414 = vadd.f32 %v150, %v413
    %415 = vmatmul.bf16.gmra.mxu0 %v283
    %v416 = vpop.f32.mrf.mxu0
    %v417 = vadd.f32 %v150, %v416
    %v418 = vpop.f32.mrf.mxu0
    %v419 = vadd.f32 %v150, %v418
    %420 = vmatmul.bf16.gmra.mxu0 %v284
    %v421 = vpop.f32.mrf.mxu0
    %v422 = vadd.f32 %v150, %v421
    %v423 = vpop.f32.mrf.mxu0
    %v424 = vadd.f32 %v150, %v423
    %425 = vmatmul.bf16.gmra.mxu0 %v285
    %v426 = vpop.f32.mrf.mxu0
    %v427 = vadd.f32 %v150, %v426
    %v428 = vpop.f32.mrf.mxu0
    %v429 = vadd.f32 %v150, %v428
    %430 = vmatmul.bf16.gmra.mxu0 %v286
    %v431 = vpop.f32.mrf.mxu0
    %v432 = vadd.f32 %v150, %v431
    %v433 = vpop.f32.mrf.mxu0
    %v434 = vadd.f32 %v150, %v433
    %435 = vmatmul.bf16.gmra.mxu0 %v287
    %v436 = vpop.f32.mrf.mxu0
    %v437 = vadd.f32 %v150, %v436
    %v438 = vpop.f32.mrf.mxu0
    %v439 = vadd.f32 %v150, %v438
    %440 = vmatmul.bf16.gmra.mxu0 %v288
    %v441 = vpop.f32.mrf.mxu0
    %v442 = vadd.f32 %v150, %v441
    %v443 = vpop.f32.mrf.mxu0
    %v444 = vadd.f32 %v150, %v443
    %445 = vmatmul.bf16.gmra.mxu0 %v289
    %v446 = vpop.f32.mrf.mxu0
    %v447 = vadd.f32 %v150, %v446
    %v448 = vpop.f32.mrf.mxu0
    %v449 = vadd.f32 %v150, %v448
    %450 = vmatmul.bf16.gmra.mxu0 %v290
    %v451 = vpop.f32.mrf.mxu0
    %v452 = vadd.f32 %v150, %v451
    %v453 = vpop.f32.mrf.mxu0
    %v454 = vadd.f32 %v150, %v453
    %455 = vmatmul.bf16.gmra.mxu0 %v291
    %v456 = vpop.f32.mrf.mxu0
    %v457 = vadd.f32 %v150, %v456
    %v458 = vpop.f32.mrf.mxu0
    %v459 = vadd.f32 %v150, %v458
    %460 = vmatmul.bf16.gmra.mxu0 %v292
    %v461 = vpop.f32.mrf.mxu0
    %v462 = vadd.f32 %v150, %v461
    %v463 = vpop.f32.mrf.mxu0
    %v464 = vadd.f32 %v150, %v463
    %465 = vmatmul.bf16.gmra.mxu0 %v293
    %v466 = vpop.f32.mrf.mxu0
    %v467 = vadd.f32 %v150, %v466
    %v468 = vpop.f32.mrf.mxu0
    %v469 = vadd.f32 %v150, %v468
    %470 = vmatmul.bf16.gmra.mxu0 %v294
    %v471 = vpop.f32.mrf.mxu0
    %v472 = vadd.f32 %v150, %v471
    %v473 = vpop.f32.mrf.mxu0
    %v474 = vadd.f32 %v150, %v473
    %475 = vmatmul.bf16.gmra.mxu0 %v295
    %v476 = vpop.f32.mrf.mxu0
    %v477 = vadd.f32 %v150, %v476
    %v478 = vpop.f32.mrf.mxu0
    %v479 = vadd.f32 %v150, %v478
    %480 = vmatmul.bf16.gmra.mxu0 %v296
    %v481 = vpop.f32.mrf.mxu0
    %v482 = vadd.f32 %v150, %v481
    %v483 = vpop.f32.mrf.mxu0
    %v484 = vadd.f32 %v150, %v483
    %485 = vmatmul.bf16.gmra.mxu0 %v297
    %v486 = vpop.f32.mrf.mxu0
    %v487 = vadd.f32 %v150, %v486
    %v488 = vpop.f32.mrf.mxu0
    %v489 = vadd.f32 %v150, %v488
    %490 = vmatmul.bf16.gmra.mxu0 %v298
    %v491 = vpop.f32.mrf.mxu0
    %v492 = vadd.f32 %v150, %v491
    %v493 = vpop.f32.mrf.mxu0
    %v494 = vadd.f32 %v150, %v493
    %495 = vmatmul.bf16.gmra.mxu0 %v299
    %v496 = vpop.f32.mrf.mxu0
    %v497 = vadd.f32 %v150, %v496
    %v498 = vpop.f32.mrf.mxu0
    %v499 = vadd.f32 %v150, %v498
    %500 = vmatmul.bf16.gmra.mxu0 %v300
    %v501 = vpop.f32.mrf.mxu0
    %v502 = vadd.f32 %v150, %v501
    %v503 = vpop.f32.mrf.mxu0
    %v504 = vadd.f32 %v150, %v503
    %505 = vmatmul.bf16.gmra.mxu0 %v301
    %v506 = vpop.f32.mrf.mxu0
    %v507 = vadd.f32 %v150, %v506
    %v508 = vpop.f32.mrf.mxu0
    %v509 = vadd.f32 %v150, %v508
    %510 = vmatmul.bf16.gmra.mxu0 %v302
    %v511 = vpop.f32.mrf.mxu0
    %v512 = vadd.f32 %v150, %v511
    %v513 = vpop.f32.mrf.mxu0
    %v514 = vadd.f32 %v150, %v513
    %515 = vmatmul.bf16.gmra.mxu0 %v303
    %v516 = vpop.f32.mrf.mxu0
    %v517 = vadd.f32 %v150, %v516
    %v518 = vpop.f32.mrf.mxu0
    %v519 = vadd.f32 %v150, %v518
    %520 = vmatmul.bf16.gmra.mxu0 %v304
    %v521 = vpop.f32.mrf.mxu0
    %v522 = vadd.f32 %v150, %v521
    %v523 = vpop.f32.mrf.mxu0
    %v524 = vadd.f32 %v150, %v523
    %525 = vmatmul.bf16.gmra.mxu0 %v305
    %v526 = vpop.f32.mrf.mxu0
    %v527 = vadd.f32 %v150, %v526
    %v528 = vpop.f32.mrf.mxu0
    %v529 = vadd.f32 %v150, %v528
    %530 = vmatmul.bf16.gmra.mxu0 %v306
    %v531 = vpop.f32.mrf.mxu0
    %v532 = vadd.f32 %v150, %v531
    %v533 = vpop.f32.mrf.mxu0
    %v534 = vadd.f32 %v150, %v533
    %535 = vmatmul.bf16.gmra.mxu0 %v307
    %v536 = vpop.f32.mrf.mxu0
    %v537 = vadd.f32 %v150, %v536
    %v538 = vpop.f32.mrf.mxu0
    %v539 = vadd.f32 %v150, %v538
    %540 = vmatmul.bf16.gmra.mxu0 %v308
    %v541 = vpop.f32.mrf.mxu0
    %v542 = vadd.f32 %v150, %v541
    %v543 = vpop.f32.mrf.mxu0
    %v544 = vadd.f32 %v150, %v543
    %545 = vmatmul.bf16.gmra.mxu0 %v309
    %v546 = vpop.f32.mrf.mxu0
    %v547 = vadd.f32 %v150, %v546
    %v548 = vpop.f32.mrf.mxu0
    %v549 = vadd.f32 %v150, %v548
    %550 = vmatmul.bf16.gmra.mxu0 %v310
    %v551 = vpop.f32.mrf.mxu0
    %v552 = vadd.f32 %v150, %v551
    %v553 = vpop.f32.mrf.mxu0
    %v554 = vadd.f32 %v150, %v553
    %555 = vmatmul.bf16.gmra.mxu0 %v311
    %v556 = vpop.f32.mrf.mxu0
    %v557 = vadd.f32 %v150, %v556
    %v558 = vpop.f32.mrf.mxu0
    %v559 = vadd.f32 %v150, %v558
    %560 = vdwg.mxu0
    %v561 = vmax.f32 %v402, 0.0
    %v562 = vmax.f32 %v404, 0.0
    %v563 = vmax.f32 %v407, 0.0
    %v564 = vmax.f32 %v409, 0.0
    %v565 = vmax.f32 %v412, 0.0
    %v566 = vmax.f32 %v414, 0.0
    %v567 = vmax.f32 %v417, 0.0
    %v568 = vmax.f32 %v419, 0.0
    %v569 = vmax.f32 %v422, 0.0
    %v570 = vmax.f32 %v424, 0.0
    %v571 = vmax.f32 %v427, 0.0
    %v572 = vmax.f32 %v429, 0.0
    %v573 = vmax.f32 %v432, 0.0
    %v574 = vmax.f32 %v434, 0.0
    %v575 = vmax.f32 %v437, 0.0
    %v576 = vmax.f32 %v439, 0.0
    %v577 = vmax.f32 %v442, 0.0
    %v578 = vmax.f32 %v444, 0.0
    %v579 = vmax.f32 %v447, 0.0
    %v580 = vmax.f32 %v449, 0.0
    %v581 = vmax.f32 %v452, 0.0
    %v582 = vmax.f32 %v454, 0.0
    %v583 = vmax.f32 %v457, 0.0
    %v584 = vmax.f32 %v459, 0.0
    %v585 = vmax.f32 %v462, 0.0
    %v586 = vmax.f32 %v464, 0.0
    %v587 = vmax.f32 %v467, 0.0
    %v588 = vmax.f32 %v469, 0.0
    %v589 = vmax.f32 %v472, 0.0
    %v590 = vmax.f32 %v474, 0.0
    %v591 = vmax.f32 %v477, 0.0
    %v592 = vmax.f32 %v479, 0.0
    %v593 = vmax.f32 %v482, 0.0
    %v594 = vmax.f32 %v484, 0.0
    %v595 = vmax.f32 %v487, 0.0
    %v596 = vmax.f32 %v489, 0.0
    %v597 = vmax.f32 %v492, 0.0
    %v598 = vmax.f32 %v494, 0.0
    %v599 = vmax.f32 %v497, 0.0
    %v600 = vmax.f32 %v499, 0.0
    %v601 = vmax.f32 %v502, 0.0
    %v602 = vmax.f32 %v504, 0.0
    %v603 = vmax.f32 %v507, 0.0
    %v604 = vmax.f32 %v509, 0.0
    %v605 = vmax.f32 %v512, 0.0
    %v606 = vmax.f32 %v514, 0.0
    %v607 = vmax.f32 %v517, 0.0
    %v608 = vmax.f32 %v519, 0.0
    %v609 = vmax.f32 %v522, 0.0
    %v610 = vmax.f32 %v524, 0.0
    %v611 = vmax.f32 %v527, 0.0
    %v612 = vmax.f32 %v529, 0.0
    %v613 = vmax.f32 %v532, 0.0
    %v614 = vmax.f32 %v534, 0.0
    %v615 = vmax.f32 %v537, 0.0
    %v616 = vmax.f32 %v539, 0.0
    %v617 = vmax.f32 %v542, 0.0
    %v618 = vmax.f32 %v544, 0.0
    %v619 = vmax.f32 %v547, 0.0
    %v620 = vmax.f32 %v549, 0.0
    %v621 = vmax.f32 %v552, 0.0
    %v622 = vmax.f32 %v554, 0.0
    %v623 = vmax.f32 %v557, 0.0
    %v624 = vmax.f32 %v559, 0.0
    %v625 = vadd.f32 %v561, %v562
    %v626 = vadd.f32 %v625, %v563
    %v627 = vadd.f32 %v626, %v564
    %v628 = vadd.f32 %v627, %v565
    %v629 = vadd.f32 %v628, %v566
    %v630 = vadd.f32 %v629, %v567
    %v631 = vadd.f32 %v630, %v568
    %v632 = vadd.f32 %v631, %v569
    %v633 = vadd.f32 %v632, %v570
    %v634 = vadd.f32 %v633, %v571
    %v635 = vadd.f32 %v634, %v572
    %v636 = vadd.f32 %v635, %v573
    %v637 = vadd.f32 %v636, %v574
    %v638 = vadd.f32 %v637, %v575
    %v639 = vadd.f32 %v638, %v576
    %v640 = vadd.f32 %v639, %v577
    %v641 = vadd.f32 %v640, %v578
    %v642 = vadd.f32 %v641, %v579
    %v643 = vadd.f32 %v642, %v580
    %v644 = vadd.f32 %v643, %v581
    %v645 = vadd.f32 %v644, %v582
    %v646 = vadd.f32 %v645, %v583
    %v647 = vadd.f32 %v646, %v584
    %v648 = vadd.f32 %v647, %v585
    %v649 = vadd.f32 %v648, %v586
    %v650 = vadd.f32 %v649, %v587
    %v651 = vadd.f32 %v650, %v588
    %v652 = vadd.f32 %v651, %v589
    %v653 = vadd.f32 %v652, %v590
    %v654 = vadd.f32 %v653, %v591
    %v655 = vadd.f32 %v654, %v592
    %v656 = vrot.slane %v655, 4
    %v657 = vadd.f32 %v655, %v656
    %v658 = vrot.slane %v657, 2
    %v659 = vadd.f32 %v657, %v658
    %v660 = vrot.slane %v659, 1
    %v661 = vadd.f32 %v659, %v660
    %v662 = vadd.f32 %v593, %v594
    %v663 = vadd.f32 %v662, %v595
    %v664 = vadd.f32 %v663, %v596
    %v665 = vadd.f32 %v664, %v597
    %v666 = vadd.f32 %v665, %v598
    %v667 = vadd.f32 %v666, %v599
    %v668 = vadd.f32 %v667, %v600
    %v669 = vadd.f32 %v668, %v601
    %v670 = vadd.f32 %v669, %v602
    %v671 = vadd.f32 %v670, %v603
    %v672 = vadd.f32 %v671, %v604
    %v673 = vadd.f32 %v672, %v605
    %v674 = vadd.f32 %v673, %v606
    %v675 = vadd.f32 %v674, %v607
    %v676 = vadd.f32 %v675, %v608
    %v677 = vadd.f32 %v676, %v609
    %v678 = vadd.f32 %v677, %v610
    %v679 = vadd.f32 %v678, %v611
    %v680 = vadd.f32 %v679, %v612
    %v681 = vadd.f32 %v680, %v613
    %v682 = vadd.f32 %v681, %v614
    %v683 = vadd.f32 %v682, %v615
    %v684 = vadd.f32 %v683, %v616
    %v685 = vadd.f32 %v684, %v617
    %v686 = vadd.f32 %v685, %v618
    %v687 = vadd.f32 %v686, %v619
    %v688 = vadd.f32 %v687, %v620
    %v689 = vadd.f32 %v688, %v621
    %v690 = vadd.f32 %v689, %v622
    %v691 = vadd.f32 %v690, %v623
    %v692 = vadd.f32 %v691, %v624
    %v693 = vrot.slane %v692, 4
    %v694 = vadd.f32 %v692, %v693
    %v695 = vrot.slane %v694, 2
    %v696 = vadd.f32 %v694, %v695
    %v697 = vrot.slane %v696, 1
    %v698 = vadd.f32 %v696, %v697
    %v699 = vpack.c.bf16 %v661, %v661
    %v700 = vpack.c.bf16 %v698, %v698
    %v701 = vld [vmem:[#allocation7] sm:$0xf]
    %v702 = vld [vmem:[#allocation7 + $0x4] sm:$0xf]
    %v703 = vld [vmem:[#allocation7 + $0x8] sm:$0xf]
    %v704 = vld [vmem:[#allocation7 + $0xc] sm:$0xf]
    %v705 = vld [vmem:[#allocation7 + $0x10] sm:$0xf]
    %v706 = vld [vmem:[#allocation7 + $0x14] sm:$0xf]
    %v707 = vld [vmem:[#allocation7 + $0x18] sm:$0xf]
    %v708 = vld [vmem:[#allocation7 + $0x1c] sm:$0xf]
    %v709 = vld [vmem:[#allocation7 + $0x20] sm:$0xf]
    %v710 = vld [vmem:[#allocation7 + $0x24] sm:$0xf]
    %v711 = vld [vmem:[#allocation7 + $0x28] sm:$0xf]
    %v712 = vld [vmem:[#allocation7 + $0x2c] sm:$0xf]
    %v713 = vld [vmem:[#allocation7 + $0x30] sm:$0xf]
    %v714 = vld [vmem:[#allocation7 + $0x34] sm:$0xf]
    %v715 = vld [vmem:[#allocation7 + $0x38] sm:$0xf]
    %v716 = vld [vmem:[#allocation7 + $0x3c] sm:$0xf]
    %v717 = vld [vmem:[%s4] sm:$0x1]
    %v719 = vperm.slane %v717, 0
    %v723 = vunpack.c.l.b16 %v699
    %v724 = vunpack.c.l.b16 %v700
    %vm725 = vcmask 1041409
    %v726 = vsel %vm725, %v724, %v723
    %v727 = vpack.c.b16 %v726, %v726
    %v745 = vunpack.c.l.b16 %v701
    %v746 = vunpack.c.l.b16 %v702
    %v747 = vunpack.c.l.b16 %v703
    %v748 = vunpack.c.l.b16 %v704
    %v749 = vunpack.c.l.b16 %v705
    %v750 = vunpack.c.l.b16 %v706
    %v751 = vunpack.c.l.b16 %v707
    %v752 = vunpack.c.l.b16 %v708
    %v753 = vunpack.c.l.b16 %v709
    %v754 = vunpack.c.l.b16 %v710
    %v755 = vunpack.c.l.b16 %v711
    %v756 = vunpack.c.l.b16 %v712
    %v757 = vunpack.c.l.b16 %v713
    %v758 = vunpack.c.l.b16 %v714
    %v759 = vunpack.c.l.b16 %v715
    %v760 = vunpack.c.l.b16 %v716
    %v761 = vpack.c.b16 %v746, %v745
    %v762 = vpack.c.b16 %v748, %v747
    %v763 = vpack.c.b16 %v750, %v749
    %v764 = vpack.c.b16 %v752, %v751
    %v765 = vpack.c.b16 %v754, %v753
    %v766 = vpack.c.b16 %v756, %v755
    %v767 = vpack.c.b16 %v758, %v757
    %v768 = vpack.c.b16 %v760, %v759
    %777 = vmatpush.bf16.msra.mxu0 %v768
    %778 = vmatpush.bf16.msra.mxu0 %v767
    %779 = vmatpush.bf16.msra.mxu0 %v766
    %780 = vmatpush.bf16.msra.mxu0 %v765
    %781 = vmatpush.bf16.msra.mxu0 %v764
    %782 = vmatpush.bf16.msra.mxu0 %v763
    %783 = vmatpush.bf16.msra.mxu0 %v762
    %784 = vmatpush.bf16.msra.mxu0 %v761
    %785 = vmatmul.bf16.gmra.mxu0 %v727
    %v786 = vpop.f32.mrf.mxu0
    %v787 = vadd.f32 %v719, %v786
    %v788 = vpop.f32.mrf.mxu0
    %789 = vdwg.mxu0
    %v790 = vmul.f32 %v787, %v787
    %vm791 = vcmask 1041408
    %v792 = vsel %vm791, %v790, 0.0
    %793 = vadd.xlane.f32.xlu0 %v792
    %v794 = vpop.xlane.xlu0 %793
    %v795 = vadd.f32 %v794, 1e-12
    %v796 = vrsqrt.pop %v795
    %v797 = vmul.f32 %v796, %v795
    %v798 = vmul.f32 %v797, %v796
    %v799 = vmul.f32 0.5, %v798
    %v800 = vsub.f32 1.5, %v799
    %v801 = vmul.f32 %v796, %v800
    %vm802 = vweird.f32 %v795
    %vm803 = vweird.f32 %v796
    %vm804 = vmor %vm802, %vm803
    %v805 = vsel %vm804, %v796, %v801
    %v806 = vmul.f32 %v787, %v805
    %807 = vst [vmem:[#allocation8] sm:$0x3] %v806
    // Predicated region
    $region34: #{tpu_custom_call.1} parent=1 // pred_check
      _
    $region35: #{tpu_custom_call.1} parent=1 // pred_check_branch
      %809 = sbr.rel (0) target = $region37
    $region36: #{tpu_custom_call.1} parent=1 // pred_region
      %811 = vsyncadd [#allocation4], 0
      %s813 = sshll.u32 [#allocation8], 4
      %s814 = int_to_ptr.vmem [resolvable:$true] %s813
      %s815 = sshll.u32 %s5, 4
      %s816 = int_to_ptr.hbm [resolvable:$true] %s815
      %818 = dma.vmem_to_hbm [thread:$0]  %s814, 32, %s816, [#allocation4]
    $region37: #{tpu_custom_call.1} parent=1 // pred_fallthru
      _
    // Predicated region
    $region38: #{tpu_custom_call.1} parent=1 // pred_check
      _
    $region39: #{tpu_custom_call.1} parent=1 // pred_check_branch
      %820 = sbr.rel (0) target = $region41
    $region40: #{tpu_custom_call.1} parent=1 // pred_region
      %822 = dma.done [#allocation4], 32
    $region41: #{tpu_custom_call.1} parent=1 // pred_fallthru
      _
    %823 = vsyncpa [#allocation3], 1
    %824 = vsyncpa [#allocation6], 1
    %825 = vsyncpa [#allocation4], 1

</llo_original>
